<compile_context>
chip_gen: v5e
topology: v5e:2x2
jax: 0.10.0
libtpu: 0.0.40
codegen_flags: <defaults>
</compile_context>

<pallas_src>
import functools

import jax
import jax.numpy as jnp
from jax import lax
from jax.experimental import pallas as pl
from jax.experimental.pallas import tpu as pltpu


# ------------------------------- tile helpers --------------------------------

def _pick_tile(dim, target, align=128):
    """Largest tile <= target that divides `dim`, preferring multiples of 128."""
    if dim <= target:
        return dim
    t = (target // align) * align
    while t >= align:
        if dim % t == 0:
            return t
        t -= align
    return dim  # fall back to a single full-dim tile


# ------------------------- tiled matmul + bias kernels ------------------------

def _mm_bias_kernel_acc(x_ref, w_ref, b_ref, o_ref, acc_ref):
    """Multi-k-step path: f32 VMEM accumulator with init/finalize epilogue."""
    @pl.when(pl.program_id(2) == 0)
    def _init():
        acc_ref[...] = jnp.zeros_like(acc_ref)

    acc_ref[...] += jnp.dot(x_ref[...], w_ref[...],
                            preferred_element_type=jnp.float32)

    @pl.when(pl.program_id(2) == pl.num_programs(2) - 1)
    def _finalize():
        o_ref[...] = (acc_ref[...] + b_ref[...]).astype(o_ref.dtype)


def _mm_bias_kernel_single_k(x_ref, w_ref, b_ref, o_ref):
    """Single-k-step path: no accumulator scratch, one lane-dense store."""
    o_ref[...] = (jnp.dot(x_ref[...], w_ref[...],
                          preferred_element_type=jnp.float32)
                  + b_ref[...]).astype(o_ref.dtype)


def pallas_matmul_bias(x, w, b, *, out_dtype=jnp.float32,
                       tm=256, tn=512, tk=512):
    """(x @ w) + b with MXU tiling.  x:[M,K] bf16, w:[K,N] bf16, b:[1,N] f32."""
    M, K = x.shape
    K2, N = w.shape
    assert K == K2 and b.shape == (1, N)
    tm, tn, tk = _pick_tile(M, tm), _pick_tile(N, tn), _pick_tile(K, tk)
    assert M % tm == 0 and N % tn == 0 and K % tk == 0, (M, N, K, tm, tn, tk)
    kt = K // tk

    single_k = kt == 1
    kernel = _mm_bias_kernel_single_k if single_k else _mm_bias_kernel_acc
    scratch = [] if single_k else [pltpu.VMEM((tm, tn), jnp.float32)]

    # Estimated VMEM footprint (double-buffered inputs/output + accumulator);
    # only raise the scoped limit when we actually exceed the v5e default.
    out_bytes = jnp.dtype(out_dtype).itemsize
    footprint = (2 * (tm * tk * 2 + tk * tn * 2 + tn * 4)
                 + 2 * tm * tn * out_bytes
                 + (0 if single_k else tm * tn * 4))
    vmem_limit = None
    if footprint > (16 << 20):
        vmem_limit = min(int(footprint * 5 // 4), 64 << 20)

    return pl.pallas_call(
        kernel,
        out_shape=jax.ShapeDtypeStruct((M, N), out_dtype),
        grid=(M // tm, N // tn, kt),
        in_specs=[
            pl.BlockSpec((tm, tk), lambda i, j, k: (i, k)),
            pl.BlockSpec((tk, tn), lambda i, j, k: (k, j)),
            pl.BlockSpec((1, tn), lambda i, j, k: (0, j)),
        ],
        out_specs=pl.BlockSpec((tm, tn), lambda i, j, k: (i, j)),
        scratch_shapes=scratch,
        compiler_params=pltpu.CompilerParams(
            dimension_semantics=("parallel", "parallel", "arbitrary"),
            vmem_limit_bytes=vmem_limit),
    )(x, w, b)


# ------------------------------ attention kernel -----------------------------

def _attention_kernel(q_ref, k_ref, v_ref, o_ref, *, num_heads, head_dim):
    # One (batch, query-tile) per grid step.  The softmax scale is already
    # folded into the Q projection, so scores are just q @ k^T.
    q_all = q_ref[0]          # [tq, E] bf16 (pre-scaled)
    k_all = k_ref[0]          # [S,  E] bf16
    v_all = v_ref[0]          # [S,  E] bf16

    for h in range(num_heads):                       # static unroll (H small)
        lo = h * head_dim
        q = q_all[:, lo:lo + head_dim]
        k = k_all[:, lo:lo + head_dim]
        v = v_all[:, lo:lo + head_dim]
        # scores = q @ k^T   (contract last dims, f32 accumulate)
        s = lax.dot_general(q, k, (((1,), (1,)), ((), ())),
                            preferred_element_type=jnp.float32)
        s = s - jnp.max(s, axis=-1, keepdims=True)
        p = jnp.exp(s)                                # f32 softmax numerator
        denom = jnp.sum(p, axis=-1, keepdims=True)    # [tq, 1]
        # Normalize AFTER the PV matmul: (p @ v) * 1/denom  (EUP reciprocal).
        o_h = jnp.dot(p.astype(v.dtype), v, preferred_element_type=jnp.float32)
        o_h = o_h * pl.reciprocal(denom, approx=True)
        # Per-head lane-dense store straight into the output block.
        o_ref[0, :, lo:lo + head_dim] = o_h.astype(o_ref.dtype)


def pallas_attention(qkv, *, num_heads):
    """qkv: [B, S, 3E] (q|k|v concatenated on last dim) -> [B, S, E] bf16."""
    B, S, E3 = qkv.shape
    E = E3 // 3
    head_dim = E // num_heads
    tq = _pick_tile(S, 256)   # parallel query-tile axis (feeds both TCs on v7x)
    kernel = functools.partial(_attention_kernel, num_heads=num_heads,
                               head_dim=head_dim)
    # TODO(synk): for long sequences (real SigLIP, S~729+), tile KV flash-style
    # (online softmax over KV tiles) instead of holding full [S,S] scores per
    # head; also transpose each K tile once per (batch, head, kv-tile).
    return pl.pallas_call(
        kernel,
        out_shape=jax.ShapeDtypeStruct((B, S, E), jnp.bfloat16),
        grid=(B, S // tq),
        in_specs=[
            pl.BlockSpec((1, tq, E), lambda b, qi: (b, qi, 0)),  # q slice
            pl.BlockSpec((1, S, E), lambda b, qi: (b, 0, 1)),    # k slice
            pl.BlockSpec((1, S, E), lambda b, qi: (b, 0, 2)),    # v slice
        ],
        out_specs=pl.BlockSpec((1, tq, E), lambda b, qi: (b, qi, 0)),
        compiler_params=pltpu.CompilerParams(
            dimension_semantics=("parallel", "parallel")),
    )(qkv, qkv, qkv)


# --------------------------- one-time parameter prep --------------------------

def prepare_params(params, cfg):
    """Hoist per-call weight work: transpose, concat, scale-fold, bf16 cast."""
    H = cfg["num_attention_heads"]
    E = cfg["hidden_size"]
    scale = (E // H) ** -0.5
    # nn.Linear stores weight as [out, in] -> transpose; fold softmax scale
    # into the Q projection (exactly equivalent: (scale*q) @ k^T).
    w_qkv = jnp.concatenate(
        [params["q_w"].T * scale, params["k_w"].T, params["v_w"].T],
        axis=1).astype(jnp.bfloat16)                                  # [E, 3E]
    b_qkv = jnp.concatenate(
        [params["q_b"] * scale, params["k_b"], params["v_b"]]
    )[None, :].astype(jnp.float32)                                    # [1, 3E]
    w_o = params["o_w"].T.astype(jnp.bfloat16)                        # [E, E]
    b_o = params["o_b"][None, :].astype(jnp.float32)                  # [1, E]
    return {"w_qkv": w_qkv, "b_qkv": b_qkv, "w_o": w_o, "b_o": b_o}


# ------------------------------ module forward -------------------------------

def siglip_attention(hidden_states, prep, cfg):
    """SiglipAttention.forward: out_proj(softmax(QK^T * scale) V)."""
    B, S, E = hidden_states.shape
    H = cfg["num_attention_heads"]

    x2d = hidden_states.reshape(B * S, E).astype(jnp.bfloat16)

    # Fused Q/K/V projection against the pre-concatenated [E, 3E] bf16 weight.
    qkv = pallas_matmul_bias(x2d, prep["w_qkv"], prep["b_qkv"],
                             out_dtype=jnp.bfloat16)                  # [B*S, 3E]
    qkv = qkv.reshape(B, S, 3 * E)   # free (row-major) reshape, no slicing

    # TODO(synk): attention dropout omitted (identity in eval / p = 0).
    attn = pallas_attention(qkv, num_heads=H)                         # bf16

    # Keep f32 output to match the PyTorch module's dtype (emit bf16 here if
    # the downstream residual add accepts it).
    out = pallas_matmul_bias(attn.reshape(B * S, E), prep["w_o"], prep["b_o"],
                             out_dtype=jnp.float32)
    return out.reshape(B, S, E)


# ------------------------------ reference (JAX) -------------------------------

def reference_attention(x, params, cfg):
    B, S, E = x.shape
    H = cfg["num_attention_heads"]
    Dh = E // H
    q = x @ params["q_w"].T + params["q_b"]
    k = x @ params["k_w"].T + params["k_b"]
    v = x @ params["v_w"].T + params["v_b"]

    def split(t):
        return t.reshape(B, S, H, Dh).transpose(0, 2, 1, 3)

    q, k, v = split(q), split(k), split(v)
    s = jnp.einsum("bhqd,bhkd->bhqk", q, k) * (Dh ** -0.5)
    p = jax.nn.softmax(s, axis=-1)
    o = jnp.einsum("bhqk,bhkd->bhqd", p, v)
    o = o.transpose(0, 2, 1, 3).reshape(B, S, E)
    return o @ params["o_w"].T + params["o_b"]


# ------------------------------ parameter init --------------------------------

def init_params(key, cfg):
    E = cfg["hidden_size"]
    ks = jax.random.split(key, 8)

    def w(k):
        return (jax.random.normal(k, (E, E)) * 0.02).astype(jnp.float32)

    def bvec(k):
        return (jax.random.normal(k, (E,)) * 0.02).astype(jnp.float32)

    return {
        "q_w": w(ks[0]), "q_b": bvec(ks[1]),
        "k_w": w(ks[2]), "k_b": bvec(ks[3]),
        "v_w": w(ks[4]), "v_b": bvec(ks[5]),
        "o_w": w(ks[6]), "o_b": bvec(ks[7]),
    }


# ------------------------------------ main ------------------------------------

if __name__ == "__main__":
    cfg = dict(hidden_size=256, num_attention_heads=2, attention_dropout=0.0)
    B, S = 2, 128

    key = jax.random.PRNGKey(0)
    k_input, k_params = jax.random.split(key)
    params = init_params(k_params, cfg)
    hidden_states = jax.random.normal(
        k_input, (B, S, cfg["hidden_size"]), dtype=jnp.float32)

    prep = prepare_params(params, cfg)     # one-time weight prep (not per call)

    out = siglip_attention(hidden_states, prep, cfg)
    out = jax.block_until_ready(out)
    assert out.shape == (B, S, cfg["hidden_size"])

    ref = reference_attention(hidden_states, params, cfg)
    max_err = float(jnp.max(jnp.abs(out - ref)))
    assert max_err < 5e-2, f"max abs err too large: {max_err}"

    print("KERNEL_OK")
</pallas_src>

<mosaic_0001>
module attributes {stable_mosaic.version = 11 : i64} {
  func.func @_mm_bias_kernel_single_k(%arg0: i32, %arg1: i32, %arg2: i32, %arg3: memref<256x256xbf16, #tpu.memory_space<vmem>>, %arg4: memref<256x384xbf16, #tpu.memory_space<vmem>>, %arg5: memref<1x384xf32, #tpu.memory_space<vmem>>, %arg6: memref<256x384xbf16, #tpu.memory_space<vmem>>) attributes {dimension_semantics = [#tpu.dimension_semantics<parallel>, #tpu.dimension_semantics<parallel>, #tpu.dimension_semantics<arbitrary>], iteration_bounds = array<i64: 1, 2, 1>, scalar_prefetch = 0 : i64, scratch_operands = 0 : i64, tpu.core_type = #tpu.core_type<tc>, window_params = [{transform_indices = @transform_0, window_bounds = array<i64: 256, 256>}, {transform_indices = @transform_1, window_bounds = array<i64: 256, 384>}, {transform_indices = @transform_2, window_bounds = array<i64: 1, 384>}, {transform_indices = @transform_3, window_bounds = array<i64: 256, 384>}]} {
    %c0 = arith.constant 0 : index
    %c0_0 = arith.constant 0 : index
    %0 = vector.load %arg3[%c0, %c0_0] : memref<256x256xbf16, #tpu.memory_space<vmem>>, vector<256x256xbf16>
    %c0_1 = arith.constant 0 : index
    %c0_2 = arith.constant 0 : index
    %1 = vector.load %arg4[%c0_1, %c0_2] : memref<256x384xbf16, #tpu.memory_space<vmem>>, vector<256x384xbf16>
    %cst = arith.constant dense<0.000000e+00> : vector<256x384xf32>
    %2 = tpu.matmul %0, %1, %cst {dimension_numbers = #tpu.dot_dimension_numbers<[1], [0], [0], [1], [0, 0, 1, 1], [], []>} : vector<256x256xbf16>, vector<256x384xbf16>, vector<256x384xf32> -> vector<256x384xf32>
    %c0_3 = arith.constant 0 : index
    %c0_4 = arith.constant 0 : index
    %3 = vector.load %arg5[%c0_3, %c0_4] : memref<1x384xf32, #tpu.memory_space<vmem>>, vector<1x384xf32>
    %4 = vector.broadcast %3 : vector<1x384xf32> to vector<256x384xf32>
    %5 = arith.addf %2, %4 : vector<256x384xf32>
    %6 = arith.truncf %5 : vector<256x384xf32> to vector<256x384xbf16>
    %c0_5 = arith.constant 0 : index
    %c0_6 = arith.constant 0 : index
    %7 = vector.load %arg6[%c0_5, %c0_6] : memref<256x384xbf16, #tpu.memory_space<vmem>>, vector<256x384xbf16>
    tpu.vector_store %arg6[%c0_5, %c0_6], %6 {strides = array<i32>} : memref<256x384xbf16, #tpu.memory_space<vmem>>, vector<256x384xbf16>,
    return
  }
  func.func @transform_0(%arg0: i32, %arg1: i32, %arg2: i32) -> (i32, i32) {
    %c0_i32 = arith.constant 0 : i32
    return %arg0, %arg2 : i32, i32
  }
  func.func @transform_1(%arg0: i32, %arg1: i32, %arg2: i32) -> (i32, i32) {
    %c0_i32 = arith.constant 0 : i32
    return %arg2, %arg1 : i32, i32
  }
  func.func @transform_2(%arg0: i32, %arg1: i32, %arg2: i32) -> (i32, i32) {
    %c0_i32 = arith.constant 0 : i32
    %c0_i32_0 = arith.constant 0 : i32
    return %c0_i32, %arg1 : i32, i32
  }
  func.func @transform_3(%arg0: i32, %arg1: i32, %arg2: i32) -> (i32, i32) {
    %c0_i32 = arith.constant 0 : i32
    return %arg0, %arg1 : i32, i32
  }
}

</mosaic_0001>

<llo_original>
// kernel: tpu_custom_call.1
$region0: #{tpu_custom_call.1}
  #allocation0 [shape = 'u32[]', space=smem, size = 0x4, offset = 0x4, fixed_abs, tag = 'smem constant byte address 0x4 - core index']
  #allocation1 [shape = 'u32[72,128]{1,0:T(1,128)}', space=vmem, size = 0x9000, scoped, tag = 'internal scratch']
  %s0 = inlined_call_operand.hbm [shape: bf16[256,256], index: 0, kind: input, shape index: {}]
  %s1 = inlined_call_operand.hbm [shape: bf16[256,768], index: 1, kind: input, shape index: {}]
  %s2 = inlined_call_operand.hbm [shape: f32[1,768], index: 2, kind: input, shape index: {}]
  %s3 = inlined_call_operand.hbm [shape: bf16[256,768], index: 3, kind: output, shape index: {}]
  %s4 = sld [smem:[#allocation0]]
  $region57: #{tpu_custom_call.1} parent=0
    _
  %s6 = ssub.s32 1, %s4
  %s7 = scalar_select 0, %s6, %s4
  $region1: #{tpu_custom_call.1} parent=0
    #allocation2 [shape = 'u8[131072]{0}', space=vmem, size = 0x20000, scoped, tag = 'input window, operand 0, single buffered']
    #allocation3 [shape = 's32[2]{0}', space=sflag, size = 0x8, scoped, tag = 'scoped memory for tpu_custom_call.1']
    #allocation4 [shape = 's32[2]{0}', space=sflag, size = 0x8, scoped, tag = 'scoped memory for tpu_custom_call.1']
    #allocation5 [shape = 'u8[393216]{0}', space=vmem, size = 0x60000, scoped, tag = 'input window, operand 1']
    #allocation6 [shape = 's32[2]{0}', space=sflag, size = 0x8, scoped, tag = 'scoped memory for tpu_custom_call.1']
    #allocation7 [shape = 'u8[3072]{0}', space=vmem, size = 0xc00, scoped, tag = 'input window, operand 2']
    #allocation8 [shape = 'u8[393216]{0}', space=vmem, size = 0x60000, scoped, tag = 'output window, operand 0']
    %8 = vsyncpa [#allocation3], 0
    %9 = vsyncpa [#allocation6], 0
    %s10 = scalar_lea.sflag [#allocation6], 1
    %11 = vsyncpa %s10, 0
    %12 = vsyncpa [#allocation4], 0
    %s13 = scalar_lea.sflag [#allocation4], 1
    %14 = vsyncpa %s13, 0
    loop: start=0, step=1, limit=4
    $region2: #{tpu_custom_call.1} parent=1 // loop_pre_header
      _
    $region3: #{tpu_custom_call.1} parent=1 // loop_header
      %s16 = sphi 0, %s20
      %p17 = scmp.ge.s32.totalorder %s16, 4
      %s23 = sphi 0, %s42
      %s24 = sphi 0, %s38
      %s25 = sphi 0, %s34
      %s26 = sphi 0, %s23
      %s27 = sphi 0, %s24
      %s28 = sphi 0, %s25
      %s29 = sphi 0, %s26
      %s30 = sphi 0, %s27
      %s31 = sphi 0, %s28
      %s47 = sphi 0, %s49
      %s50 = sphi 0, %s47
      %s51 = sphi 0, %s50
      %s67 = sphi 0, %s51
      %s75 = sphi 0, %s77
      %s78 = sphi 0, %s75
      %s79 = sphi 0, %s78
      %s95 = sphi 0, %s79
      %s101 = sphi 0, %s103
      %s104 = sphi 0, %s101
      %s105 = sphi 0, %s104
      %s121 = sphi 0, %s105
      %s129 = sphi 0, %s131
      %s132 = sphi 0, %s129
      %s133 = sphi 0, %s132
      %s149 = sphi 0, %s133
    $region4: #{tpu_custom_call.1} parent=1 // loop_header_branch
      %19 = sbr.rel (%p17) target = $region8
    $region5: #{tpu_custom_call.1} parent=1 // loop_body
      %s21 = ssub.s32 %s16, 1
      %s22 = ssub.s32 %s16, 2
      %s32 = sadd.s32 1, %s25
      %p33 = scmp.ge.s32.totalorder %s32, 1
      %s34 = scalar_select %p33, 0, %s32
      %s35 = sadd.s32 1, %s24
      %s36 = scalar_select %p33, %s35, %s24
      %p37 = scmp.ge.s32.totalorder %s36, 2
      %s38 = scalar_select %p37, 0, %s36
      %s39 = sadd.s32 1, %s23
      %s40 = scalar_select %p37, %s39, %s23
      %p41 = scmp.ge.s32.totalorder %s40, 1
      %s42 = scalar_select %p41, 0, %s40
      %s43 = ssub.s32 %s23, %s42
      %s44 = ssub.s32 %s25, %s34
      %s45 = sor.u32 %s43, %s44
      %p46 = scmp.eq.s32.totalorder %s45, 0
      %s48 = sadd.s32 %s47, 1
      %s49 = scalar_select %p46, %s47, %s48
      %p52 = pneg %p46
      %p53 = scmp.eq.s32.totalorder %s16, 1
      %p54 = por %p52, %p53
      %p55 = scmp.ne.s32.totalorder %s47, %s50
      %p56 = scmp.eq.s32.totalorder %s16, 0
      %p57 = por %p55, %p56
      %p58 = scmp.ne.s32.totalorder %s47, %s50
      %p59 = scmp.eq.s32.totalorder %s21, 1
      %p60 = por %p58, %p59
      %p61 = scmp.ne.s32.totalorder %s50, %s51
      %p62 = scmp.eq.s32.totalorder %s21, 0
      %p63 = por %p61, %p62
      %p64 = scmp.ne.s32.totalorder %s50, %s51
      %p65 = scmp.eq.s32.totalorder %s22, 1
      %p66 = por %p64, %p65
      %p68 = scmp.ne.s32.totalorder %s51, %s67
      %p69 = scmp.eq.s32.totalorder %s22, 0
      %p70 = por %p68, %p69
      %s71 = ssub.s32 %s25, %s34
      %s72 = ssub.s32 %s24, %s38
      %s73 = sor.u32 %s71, %s72
      %p74 = scmp.eq.s32.totalorder %s73, 0
      %s76 = sadd.s32 %s75, 1
      %s77 = scalar_select %p74, %s75, %s76
      %p80 = pneg %p74
      %p81 = scmp.eq.s32.totalorder %s16, 1
      %p82 = por %p80, %p81
      %p83 = scmp.ne.s32.totalorder %s75, %s78
      %p84 = scmp.eq.s32.totalorder %s16, 0
      %p85 = por %p83, %p84
      %p86 = scmp.ne.s32.totalorder %s75, %s78
      %p87 = scmp.eq.s32.totalorder %s21, 1
      %p88 = por %p86, %p87
      %p89 = scmp.ne.s32.totalorder %s78, %s79
      %p90 = scmp.eq.s32.totalorder %s21, 0
      %p91 = por %p89, %p90
      %p92 = scmp.ne.s32.totalorder %s78, %s79
      %p93 = scmp.eq.s32.totalorder %s22, 1
      %p94 = por %p92, %p93
      %p96 = scmp.ne.s32.totalorder %s79, %s95
      %p97 = scmp.eq.s32.totalorder %s22, 0
      %p98 = por %p96, %p97
      %s99 = ssub.s32 %s24, %s38
      %p100 = scmp.eq.s32.totalorder %s99, 0
      %s102 = sadd.s32 %s101, 1
      %s103 = scalar_select %p100, %s101, %s102
      %p106 = pneg %p100
      %p107 = scmp.eq.s32.totalorder %s16, 1
      %p108 = por %p106, %p107
      %p109 = scmp.ne.s32.totalorder %s101, %s104
      %p110 = scmp.eq.s32.totalorder %s16, 0
      %p111 = por %p109, %p110
      %p112 = scmp.ne.s32.totalorder %s101, %s104
      %p113 = scmp.eq.s32.totalorder %s21, 1
      %p114 = por %p112, %p113
      %p115 = scmp.ne.s32.totalorder %s104, %s105
      %p116 = scmp.eq.s32.totalorder %s21, 0
      %p117 = por %p115, %p116
      %p118 = scmp.ne.s32.totalorder %s104, %s105
      %p119 = scmp.eq.s32.totalorder %s22, 1
      %p120 = por %p118, %p119
      %p122 = scmp.ne.s32.totalorder %s105, %s121
      %p123 = scmp.eq.s32.totalorder %s22, 0
      %p124 = por %p122, %p123
      %s125 = ssub.s32 %s23, %s42
      %s126 = ssub.s32 %s24, %s38
      %s127 = sor.u32 %s125, %s126
      %p128 = scmp.eq.s32.totalorder %s127, 0
      %s130 = sadd.s32 %s129, 1
      %s131 = scalar_select %p128, %s129, %s130
      %p134 = pneg %p128
      %p135 = scmp.eq.s32.totalorder %s16, 1
      %p136 = por %p134, %p135
      %p137 = scmp.ne.s32.totalorder %s129, %s132
      %p138 = scmp.eq.s32.totalorder %s16, 0
      %p139 = por %p137, %p138
      %p140 = scmp.ne.s32.totalorder %s129, %s132
      %p141 = scmp.eq.s32.totalorder %s21, 1
      %p142 = por %p140, %p141
      %p143 = scmp.ne.s32.totalorder %s132, %s133
      %p144 = scmp.eq.s32.totalorder %s21, 0
      %p145 = por %p143, %p144
      %p146 = scmp.ne.s32.totalorder %s132, %s133
      %p147 = scmp.eq.s32.totalorder %s22, 1
      %p148 = por %p146, %p147
      %p150 = scmp.ne.s32.totalorder %s133, %s149
      %p151 = scmp.eq.s32.totalorder %s22, 0
      %p152 = por %p150, %p151
      %p153 = scmp.le.s32.totalorder 1, %s16
      %p154 = scmp.lt.s32.totalorder %s16, 3
      %p155 = pnand %p153, %p154
      %p156 = pneg %p155
      // Predicated region
      $region9: #{tpu_custom_call.1} parent=5 // pred_check
        _
      $region10: #{tpu_custom_call.1} parent=5 // pred_check_branch
        %158 = sbr.rel (%p155) target = $region12
      $region11: #{tpu_custom_call.1} parent=5 // pred_region
        %s159 = ssub.s32 %s16, 1
        // Predicated region
        $region13: #{tpu_custom_call.1} parent=11 // pred_check
          %p160 = pneg %p63
        $region14: #{tpu_custom_call.1} parent=11 // pred_check_branch
          %162 = sbr.rel (%p160) target = $region16
        $region15: #{tpu_custom_call.1} parent=11 // pred_region
          %s163 = smul.u32 32, %s26
          %s164 = smul.u32 2, %s28
          %166 = vsyncadd [#allocation3], 0
          %s167 = smul.addr %s163, 2
          %s168 = sadd.s32 %s164, %s167
          %s169 = smul.addr %s168, 4
          %s170 = scalar_lea.hbm %s0, %s169
          %s171 = sshll.u32 %s170, 4
          %s172 = int_to_ptr.hbm [resolvable:$true] %s171
          %s173 = sshll.u32 [#allocation2], 4
          %s174 = int_to_ptr.vmem [resolvable:$true] %s173
          %179 = dma.hbm_to_vmem [thread:$0]  %s172, 4096, %s174, [#allocation3], 128, 128, 8
        $region16: #{tpu_custom_call.1} parent=11 // pred_fallthru
          _
      $region12: #{tpu_custom_call.1} parent=5 // pred_fallthru
        _
      %p180 = scmp.lt.s32.totalorder %s16, 2
      // Predicated region
      $region17: #{tpu_custom_call.1} parent=5 // pred_check
        %p181 = pneg %p180
      $region18: #{tpu_custom_call.1} parent=5 // pred_check_branch
        %183 = sbr.rel (%p181) target = $region20
      $region19: #{tpu_custom_call.1} parent=5 // pred_region
        // Predicated region
        $region21: #{tpu_custom_call.1} parent=19 // pred_check
          %p184 = pneg %p85
        $region22: #{tpu_custom_call.1} parent=19 // pred_check_branch
          %186 = sbr.rel (%p184) target = $region24
        $region23: #{tpu_custom_call.1} parent=19 // pred_region
          %s187 = sand.u32 %s16, 1
          %s188 = scalar_lea.sflag [#allocation6], %s187
          %s189 = sand.u32 %s75, 1
          %s190 = smul.addr %s189, 384
          %s191 = scalar_lea.vmem [#allocation5], %s190
          %s192 = smul.u32 32, %s25
          %s193 = smul.u32 3, %s24
          %195 = vsyncadd %s188, 0
          %s196 = smul.addr %s192, 6
          %s197 = sadd.s32 %s193, %s196
          %s198 = smul.addr %s197, 4
          %s199 = scalar_lea.hbm %s1, %s198
          %s200 = sshll.u32 %s199, 4
          %s201 = int_to_ptr.hbm [resolvable:$true] %s200
          %s202 = sshll.u32 %s191, 4
          %s203 = int_to_ptr.vmem [resolvable:$true] %s202
          %208 = dma.hbm_to_vmem [thread:$0]  %s201, 6144, %s203, %s188, 384, 192, 12
        $region24: #{tpu_custom_call.1} parent=19 // pred_fallthru
          _
        // Predicated region
        $region25: #{tpu_custom_call.1} parent=19 // pred_check
          %p209 = pneg %p111
        $region26: #{tpu_custom_call.1} parent=19 // pred_check_branch
          %211 = sbr.rel (%p209) target = $region28
        $region27: #{tpu_custom_call.1} parent=19 // pred_region
          %s212 = sand.u32 %s16, 1
          %s213 = scalar_lea.sflag [#allocation6], %s212
          %s214 = sand.u32 %s101, 1
          %s215 = smul.addr %s214, 3
          %s216 = scalar_lea.vmem [#allocation7], %s215
          %s217 = smul.u32 3, %s24
          %219 = vsyncadd %s213, 0
          %s220 = scalar_lea.hbm %s2, %s217
          %s222 = sshll.u32 %s220, 4
          %s223 = int_to_ptr.hbm [resolvable:$true] %s222
          %s224 = sshll.u32 %s216, 4
          %s225 = int_to_ptr.vmem [resolvable:$true] %s224
          %227 = dma.hbm_to_vmem [thread:$0]  %s223, 48, %s225, %s213
        $region28: #{tpu_custom_call.1} parent=19 // pred_fallthru
          _
      $region20: #{tpu_custom_call.1} parent=5 // pred_fallthru
        _
      %p228 = scmp.le.s32.totalorder 1, %s16
      %p229 = scmp.lt.s32.totalorder %s16, 3
      %p230 = pnand %p228, %p229
      %p231 = pneg %p230
      // Predicated region
      $region29: #{tpu_custom_call.1} parent=5 // pred_check
        _
      $region30: #{tpu_custom_call.1} parent=5 // pred_check_branch
        %233 = sbr.rel (%p230) target = $region32
      $region31: #{tpu_custom_call.1} parent=5 // pred_region
        %s234 = ssub.s32 %s16, 1
        // Predicated region
        $region33: #{tpu_custom_call.1} parent=31 // pred_check
          %p235 = pneg %p63
        $region34: #{tpu_custom_call.1} parent=31 // pred_check_branch
          %237 = sbr.rel (%p235) target = $region36
        $region35: #{tpu_custom_call.1} parent=31 // pred_region
          %239 = dma.done [#allocation3], 4096
        $region36: #{tpu_custom_call.1} parent=31 // pred_fallthru
          _
        %s240 = sand.u32 %s21, 1
        %s241 = scalar_lea.sflag [#allocation6], %s240
        %s242 = sand.u32 %s78, 1
        %s243 = smul.addr %s242, 384
        %s244 = scalar_lea.vmem [#allocation5], %s243
        // Predicated region
        $region37: #{tpu_custom_call.1} parent=31 // pred_check
          %p245 = pneg %p91
        $region38: #{tpu_custom_call.1} parent=31 // pred_check_branch
          %247 = sbr.rel (%p245) target = $region40
        $region39: #{tpu_custom_call.1} parent=31 // pred_region
          %249 = dma.done %s241, 6144
        $region40: #{tpu_custom_call.1} parent=31 // pred_fallthru
          _
        %s250 = sand.u32 %s21, 1
        %s251 = scalar_lea.sflag [#allocation6], %s250
        %s252 = sand.u32 %s104, 1
        %s253 = smul.addr %s252, 3
        %s254 = scalar_lea.vmem [#allocation7], %s253
        // Predicated region
        $region41: #{tpu_custom_call.1} parent=31 // pred_check
          %p255 = pneg %p117
        $region42: #{tpu_custom_call.1} parent=31 // pred_check_branch
          %257 = sbr.rel (%p255) target = $region44
        $region43: #{tpu_custom_call.1} parent=31 // pred_region
          %259 = dma.done %s251, 48
        $region44: #{tpu_custom_call.1} parent=31 // pred_fallthru
          _
        %p260 = pneg %p63
        %p261 = pneg %p60
        %s262 = sand.u32 %s21, 1
        %s263 = scalar_lea.sflag [#allocation6], %s262
        %s264 = sand.u32 %s78, 1
        %s265 = smul.addr %s264, 384
        %s266 = scalar_lea.vmem [#allocation5], %s265
        %p267 = pneg %p91
        %p268 = pneg %p88
        %s269 = sand.u32 %s21, 1
        %s270 = scalar_lea.sflag [#allocation6], %s269
        %s271 = sand.u32 %s104, 1
        %s272 = smul.addr %s271, 3
        %s273 = scalar_lea.vmem [#allocation7], %s272
        %p274 = pneg %p117
        %p275 = pneg %p114
        %p276 = pneg %p145
        %p277 = pneg %p142
        %s278 = sand.u32 %s132, 1
        %s279 = scalar_lea.sflag [#allocation4], %s278
        %s280 = sand.u32 %s132, 1
        %s281 = smul.addr %s280, 384
        %s282 = scalar_lea.vmem [#allocation8], %s281
        %s283 = smul.u32 32, %s26
        %s284 = smul.u32 2, %s28
        %s285 = smul.u32 32, %s28
        %s286 = smul.u32 3, %s27
        %s287 = smul.u32 3, %s27
        %s288 = smul.u32 32, %s26
        %s289 = smul.u32 3, %s27
        %v290 = vld [vmem:[#allocation2] sm:$0xff]
        %v291 = vld [vmem:[#allocation2 + $0x8] sm:$0xff]
        %v292 = vld [vmem:[#allocation2 + $0x10] sm:$0xff]
        %v293 = vld [vmem:[#allocation2 + $0x18] sm:$0xff]
        %v294 = vld [vmem:[#allocation2 + $0x20] sm:$0xff]
        %v295 = vld [vmem:[#allocation2 + $0x28] sm:$0xff]
        %v296 = vld [vmem:[#allocation2 + $0x30] sm:$0xff]
        %v297 = vld [vmem:[#allocation2 + $0x38] sm:$0xff]
        %v298 = vld [vmem:[#allocation2 + $0x40] sm:$0xff]
        %v299 = vld [vmem:[#allocation2 + $0x48] sm:$0xff]
        %v300 = vld [vmem:[#allocation2 + $0x50] sm:$0xff]
        %v301 = vld [vmem:[#allocation2 + $0x58] sm:$0xff]
        %v302 = vld [vmem:[#allocation2 + $0x60] sm:$0xff]
        %v303 = vld [vmem:[#allocation2 + $0x68] sm:$0xff]
        %v304 = vld [vmem:[#allocation2 + $0x70] sm:$0xff]
        %v305 = vld [vmem:[#allocation2 + $0x78] sm:$0xff]
        %v306 = vld [vmem:[#allocation2 + $0x80] sm:$0xff]
        %v307 = vld [vmem:[#allocation2 + $0x88] sm:$0xff]
        %v308 = vld [vmem:[#allocation2 + $0x90] sm:$0xff]
        %v309 = vld [vmem:[#allocation2 + $0x98] sm:$0xff]
        %v310 = vld [vmem:[#allocation2 + $0xa0] sm:$0xff]
        %v311 = vld [vmem:[#allocation2 + $0xa8] sm:$0xff]
        %v312 = vld [vmem:[#allocation2 + $0xb0] sm:$0xff]
        %v313 = vld [vmem:[#allocation2 + $0xb8] sm:$0xff]
        %v314 = vld [vmem:[#allocation2 + $0xc0] sm:$0xff]
        %v315 = vld [vmem:[#allocation2 + $0xc8] sm:$0xff]
        %v316 = vld [vmem:[#allocation2 + $0xd0] sm:$0xff]
        %v317 = vld [vmem:[#allocation2 + $0xd8] sm:$0xff]
        %v318 = vld [vmem:[#allocation2 + $0xe0] sm:$0xff]
        %v319 = vld [vmem:[#allocation2 + $0xe8] sm:$0xff]
        %v320 = vld [vmem:[#allocation2 + $0xf0] sm:$0xff]
        %v321 = vld [vmem:[#allocation2 + $0xf8] sm:$0xff]
        %v322 = vld [vmem:[%s244] sm:$0xff]
        %v323 = vld [vmem:[%s244 + $0x8] sm:$0xf]
        %v324 = vld [vmem:[%s244 + $0xc] sm:$0xff]
        %v325 = vld [vmem:[%s244 + $0x14] sm:$0xf]
        %v326 = vld [vmem:[%s244 + $0x18] sm:$0xff]
        %v327 = vld [vmem:[%s244 + $0x20] sm:$0xf]
        %v328 = vld [vmem:[%s244 + $0x24] sm:$0xff]
        %v329 = vld [vmem:[%s244 + $0x2c] sm:$0xf]
        %v330 = vld [vmem:[%s244 + $0x30] sm:$0xff]
        %v331 = vld [vmem:[%s244 + $0x38] sm:$0xf]
        %v332 = vld [vmem:[%s244 + $0x3c] sm:$0xff]
        %v333 = vld [vmem:[%s244 + $0x44] sm:$0xf]
        %v334 = vld [vmem:[%s244 + $0x48] sm:$0xff]
        %v335 = vld [vmem:[%s244 + $0x50] sm:$0xf]
        %v336 = vld [vmem:[%s244 + $0x54] sm:$0xff]
        %v337 = vld [vmem:[%s244 + $0x5c] sm:$0xf]
        %v338 = vld [vmem:[%s244 + $0x60] sm:$0xff]
        %v339 = vld [vmem:[%s244 + $0x68] sm:$0xf]
        %v340 = vld [vmem:[%s244 + $0x6c] sm:$0xff]
        %v341 = vld [vmem:[%s244 + $0x74] sm:$0xf]
        %v342 = vld [vmem:[%s244 + $0x78] sm:$0xff]
        %v343 = vld [vmem:[%s244 + $0x80] sm:$0xf]
        %v344 = vld [vmem:[%s244 + $0x84] sm:$0xff]
        %v345 = vld [vmem:[%s244 + $0x8c] sm:$0xf]
        %v346 = vld [vmem:[%s244 + $0x90] sm:$0xff]
        %v347 = vld [vmem:[%s244 + $0x98] sm:$0xf]
        %v348 = vld [vmem:[%s244 + $0x9c] sm:$0xff]
        %v349 = vld [vmem:[%s244 + $0xa4] sm:$0xf]
        %v350 = vld [vmem:[%s244 + $0xa8] sm:$0xff]
        %v351 = vld [vmem:[%s244 + $0xb0] sm:$0xf]
        %v352 = vld [vmem:[%s244 + $0xb4] sm:$0xff]
        %v353 = vld [vmem:[%s244 + $0xbc] sm:$0xf]
        %v354 = vld [vmem:[%s244 + $0xc0] sm:$0xff]
        %v355 = vld [vmem:[%s244 + $0xc8] sm:$0xf]
        %v356 = vld [vmem:[%s244 + $0xcc] sm:$0xff]
        %v357 = vld [vmem:[%s244 + $0xd4] sm:$0xf]
        %v358 = vld [vmem:[%s244 + $0xd8] sm:$0xff]
        %v359 = vld [vmem:[%s244 + $0xe0] sm:$0xf]
        %v360 = vld [vmem:[%s244 + $0xe4] sm:$0xff]
        %v361 = vld [vmem:[%s244 + $0xec] sm:$0xf]
        %v362 = vld [vmem:[%s244 + $0xf0] sm:$0xff]
        %v363 = vld [vmem:[%s244 + $0xf8] sm:$0xf]
        %v364 = vld [vmem:[%s244 + $0xfc] sm:$0xff]
        %v365 = vld [vmem:[%s244 + $0x104] sm:$0xf]
        %v366 = vld [vmem:[%s244 + $0x108] sm:$0xff]
        %v367 = vld [vmem:[%s244 + $0x110] sm:$0xf]
        %v368 = vld [vmem:[%s244 + $0x114] sm:$0xff]
        %v369 = vld [vmem:[%s244 + $0x11c] sm:$0xf]
        %v370 = vld [vmem:[%s244 + $0x120] sm:$0xff]
        %v371 = vld [vmem:[%s244 + $0x128] sm:$0xf]
        %v372 = vld [vmem:[%s244 + $0x12c] sm:$0xff]
        %v373 = vld [vmem:[%s244 + $0x134] sm:$0xf]
        %v374 = vld [vmem:[%s244 + $0x138] sm:$0xff]
        %v375 = vld [vmem:[%s244 + $0x140] sm:$0xf]
        %v376 = vld [vmem:[%s244 + $0x144] sm:$0xff]
        %v377 = vld [vmem:[%s244 + $0x14c] sm:$0xf]
        %v378 = vld [vmem:[%s244 + $0x150] sm:$0xff]
        %v379 = vld [vmem:[%s244 + $0x158] sm:$0xf]
        %v380 = vld [vmem:[%s244 + $0x15c] sm:$0xff]
        %v381 = vld [vmem:[%s244 + $0x164] sm:$0xf]
        %v382 = vld [vmem:[%s244 + $0x168] sm:$0xff]
        %v383 = vld [vmem:[%s244 + $0x170] sm:$0xf]
        %v384 = vld [vmem:[%s244 + $0x174] sm:$0xff]
        %v385 = vld [vmem:[%s244 + $0x17c] sm:$0xf]
        %v386 = vld [vmem:[%s254] sm:$0x7]
        %v388 = vperm.slane %v386, 0
        %v389 = vperm.slane %v386, 1
        %v390 = vperm.slane %v386, 2
        %v426 = vunpack.c.l.b16 %v290
        %v427 = vunpack.c.h.b16 %v290
        %v428 = vunpack.c.l.b16 %v291
        %v429 = vunpack.c.h.b16 %v291
        %v430 = vunpack.c.l.b16 %v292
        %v431 = vunpack.c.h.b16 %v292
        %v432 = vunpack.c.l.b16 %v293
        %v433 = vunpack.c.h.b16 %v293
        %v434 = vunpack.c.l.b16 %v294
        %v435 = vunpack.c.h.b16 %v294
        %v436 = vunpack.c.l.b16 %v295
        %v437 = vunpack.c.h.b16 %v295
        %v438 = vunpack.c.l.b16 %v296
        %v439 = vunpack.c.h.b16 %v296
        %v440 = vunpack.c.l.b16 %v297
        %v441 = vunpack.c.h.b16 %v297
        %v442 = vunpack.c.l.b16 %v298
        %v443 = vunpack.c.h.b16 %v298
        %v444 = vunpack.c.l.b16 %v299
        %v445 = vunpack.c.h.b16 %v299
        %v446 = vunpack.c.l.b16 %v300
        %v447 = vunpack.c.h.b16 %v300
        %v448 = vunpack.c.l.b16 %v301
        %v449 = vunpack.c.h.b16 %v301
        %v450 = vunpack.c.l.b16 %v302
        %v451 = vunpack.c.h.b16 %v302
        %v452 = vunpack.c.l.b16 %v303
        %v453 = vunpack.c.h.b16 %v303
        %v454 = vunpack.c.l.b16 %v304
        %v455 = vunpack.c.h.b16 %v304
        %v456 = vunpack.c.l.b16 %v305
        %v457 = vunpack.c.h.b16 %v305
        %v458 = vunpack.c.l.b16 %v306
        %v459 = vunpack.c.h.b16 %v306
        %v460 = vunpack.c.l.b16 %v307
        %v461 = vunpack.c.h.b16 %v307
        %v462 = vunpack.c.l.b16 %v308
        %v463 = vunpack.c.h.b16 %v308
        %v464 = vunpack.c.l.b16 %v309
        %v465 = vunpack.c.h.b16 %v309
        %v466 = vunpack.c.l.b16 %v310
        %v467 = vunpack.c.h.b16 %v310
        %v468 = vunpack.c.l.b16 %v311
        %v469 = vunpack.c.h.b16 %v311
        %v470 = vunpack.c.l.b16 %v312
        %v471 = vunpack.c.h.b16 %v312
        %v472 = vunpack.c.l.b16 %v313
        %v473 = vunpack.c.h.b16 %v313
        %v474 = vunpack.c.l.b16 %v314
        %v475 = vunpack.c.h.b16 %v314
        %v476 = vunpack.c.l.b16 %v315
        %v477 = vunpack.c.h.b16 %v315
        %v478 = vunpack.c.l.b16 %v316
        %v479 = vunpack.c.h.b16 %v316
        %v480 = vunpack.c.l.b16 %v317
        %v481 = vunpack.c.h.b16 %v317
        %v482 = vunpack.c.l.b16 %v318
        %v483 = vunpack.c.h.b16 %v318
        %v484 = vunpack.c.l.b16 %v319
        %v485 = vunpack.c.h.b16 %v319
        %v486 = vunpack.c.l.b16 %v320
        %v487 = vunpack.c.h.b16 %v320
        %v488 = vunpack.c.l.b16 %v321
        %v489 = vunpack.c.h.b16 %v321
        %v490 = vpack.c.b16 %v428, %v426
        %v491 = vpack.c.b16 %v429, %v427
        %v492 = vpack.c.b16 %v432, %v430
        %v493 = vpack.c.b16 %v433, %v431
        %v494 = vpack.c.b16 %v436, %v434
        %v495 = vpack.c.b16 %v437, %v435
        %v496 = vpack.c.b16 %v440, %v438
        %v497 = vpack.c.b16 %v441, %v439
        %v498 = vpack.c.b16 %v444, %v442
        %v499 = vpack.c.b16 %v445, %v443
        %v500 = vpack.c.b16 %v448, %v446
        %v501 = vpack.c.b16 %v449, %v447
        %v502 = vpack.c.b16 %v452, %v450
        %v503 = vpack.c.b16 %v453, %v451
        %v504 = vpack.c.b16 %v456, %v454
        %v505 = vpack.c.b16 %v457, %v455
        %v506 = vpack.c.b16 %v460, %v458
        %v507 = vpack.c.b16 %v461, %v459
        %v508 = vpack.c.b16 %v464, %v462
        %v509 = vpack.c.b16 %v465, %v463
        %v510 = vpack.c.b16 %v468, %v466
        %v511 = vpack.c.b16 %v469, %v467
        %v512 = vpack.c.b16 %v472, %v470
        %v513 = vpack.c.b16 %v473, %v471
        %v514 = vpack.c.b16 %v476, %v474
        %v515 = vpack.c.b16 %v477, %v475
        %v516 = vpack.c.b16 %v480, %v478
        %v517 = vpack.c.b16 %v481, %v479
        %v518 = vpack.c.b16 %v484, %v482
        %v519 = vpack.c.b16 %v485, %v483
        %v520 = vpack.c.b16 %v488, %v486
        %v521 = vpack.c.b16 %v489, %v487
        %v618 = vunpack.c.l.b16 %v322
        %v619 = vunpack.c.h.b16 %v322
        %v620 = vunpack.c.l.b16 %v323
        %v621 = vunpack.c.l.b16 %v324
        %v622 = vunpack.c.h.b16 %v324
        %v623 = vunpack.c.l.b16 %v325
        %v624 = vunpack.c.l.b16 %v326
        %v625 = vunpack.c.h.b16 %v326
        %v626 = vunpack.c.l.b16 %v327
        %v627 = vunpack.c.l.b16 %v328
        %v628 = vunpack.c.h.b16 %v328
        %v629 = vunpack.c.l.b16 %v329
        %v630 = vunpack.c.l.b16 %v330
        %v631 = vunpack.c.h.b16 %v330
        %v632 = vunpack.c.l.b16 %v331
        %v633 = vunpack.c.l.b16 %v332
        %v634 = vunpack.c.h.b16 %v332
        %v635 = vunpack.c.l.b16 %v333
        %v636 = vunpack.c.l.b16 %v334
        %v637 = vunpack.c.h.b16 %v334
        %v638 = vunpack.c.l.b16 %v335
        %v639 = vunpack.c.l.b16 %v336
        %v640 = vunpack.c.h.b16 %v336
        %v641 = vunpack.c.l.b16 %v337
        %v642 = vunpack.c.l.b16 %v338
        %v643 = vunpack.c.h.b16 %v338
        %v644 = vunpack.c.l.b16 %v339
        %v645 = vunpack.c.l.b16 %v340
        %v646 = vunpack.c.h.b16 %v340
        %v647 = vunpack.c.l.b16 %v341
        %v648 = vunpack.c.l.b16 %v342
        %v649 = vunpack.c.h.b16 %v342
        %v650 = vunpack.c.l.b16 %v343
        %v651 = vunpack.c.l.b16 %v344
        %v652 = vunpack.c.h.b16 %v344
        %v653 = vunpack.c.l.b16 %v345
        %v654 = vunpack.c.l.b16 %v346
        %v655 = vunpack.c.h.b16 %v346
        %v656 = vunpack.c.l.b16 %v347
        %v657 = vunpack.c.l.b16 %v348
        %v658 = vunpack.c.h.b16 %v348
        %v659 = vunpack.c.l.b16 %v349
        %v660 = vunpack.c.l.b16 %v350
        %v661 = vunpack.c.h.b16 %v350
        %v662 = vunpack.c.l.b16 %v351
        %v663 = vunpack.c.l.b16 %v352
        %v664 = vunpack.c.h.b16 %v352
        %v665 = vunpack.c.l.b16 %v353
        %v666 = vunpack.c.l.b16 %v354
        %v667 = vunpack.c.h.b16 %v354
        %v668 = vunpack.c.l.b16 %v355
        %v669 = vunpack.c.l.b16 %v356
        %v670 = vunpack.c.h.b16 %v356
        %v671 = vunpack.c.l.b16 %v357
        %v672 = vunpack.c.l.b16 %v358
        %v673 = vunpack.c.h.b16 %v358
        %v674 = vunpack.c.l.b16 %v359
        %v675 = vunpack.c.l.b16 %v360
        %v676 = vunpack.c.h.b16 %v360
        %v677 = vunpack.c.l.b16 %v361
        %v678 = vunpack.c.l.b16 %v362
        %v679 = vunpack.c.h.b16 %v362
        %v680 = vunpack.c.l.b16 %v363
        %v681 = vunpack.c.l.b16 %v364
        %v682 = vunpack.c.h.b16 %v364
        %v683 = vunpack.c.l.b16 %v365
        %v684 = vunpack.c.l.b16 %v366
        %v685 = vunpack.c.h.b16 %v366
        %v686 = vunpack.c.l.b16 %v367
        %v687 = vunpack.c.l.b16 %v368
        %v688 = vunpack.c.h.b16 %v368
        %v689 = vunpack.c.l.b16 %v369
        %v690 = vunpack.c.l.b16 %v370
        %v691 = vunpack.c.h.b16 %v370
        %v692 = vunpack.c.l.b16 %v371
        %v693 = vunpack.c.l.b16 %v372
        %v694 = vunpack.c.h.b16 %v372
        %v695 = vunpack.c.l.b16 %v373
        %v696 = vunpack.c.l.b16 %v374
        %v697 = vunpack.c.h.b16 %v374
        %v698 = vunpack.c.l.b16 %v375
        %v699 = vunpack.c.l.b16 %v376
        %v700 = vunpack.c.h.b16 %v376
        %v701 = vunpack.c.l.b16 %v377
        %v702 = vunpack.c.l.b16 %v378
        %v703 = vunpack.c.h.b16 %v378
        %v704 = vunpack.c.l.b16 %v379
        %v705 = vunpack.c.l.b16 %v380
        %v706 = vunpack.c.h.b16 %v380
        %v707 = vunpack.c.l.b16 %v381
        %v708 = vunpack.c.l.b16 %v382
        %v709 = vunpack.c.h.b16 %v382
        %v710 = vunpack.c.l.b16 %v383
        %v711 = vunpack.c.l.b16 %v384
        %v712 = vunpack.c.h.b16 %v384
        %v713 = vunpack.c.l.b16 %v385
        %v714 = vpack.c.b16 %v621, %v618
        %v715 = vpack.c.b16 %v622, %v619
        %v716 = vpack.c.b16 %v623, %v620
        %v717 = vpack.c.b16 %v627, %v624
        %v718 = vpack.c.b16 %v628, %v625
        %v719 = vpack.c.b16 %v629, %v626
        %v720 = vpack.c.b16 %v633, %v630
        %v721 = vpack.c.b16 %v634, %v631
        %v722 = vpack.c.b16 %v635, %v632
        %v723 = vpack.c.b16 %v639, %v636
        %v724 = vpack.c.b16 %v640, %v637
        %v725 = vpack.c.b16 %v641, %v638
        %v726 = vpack.c.b16 %v645, %v642
        %v727 = vpack.c.b16 %v646, %v643
        %v728 = vpack.c.b16 %v647, %v644
        %v729 = vpack.c.b16 %v651, %v648
        %v730 = vpack.c.b16 %v652, %v649
        %v731 = vpack.c.b16 %v653, %v650
        %v732 = vpack.c.b16 %v657, %v654
        %v733 = vpack.c.b16 %v658, %v655
        %v734 = vpack.c.b16 %v659, %v656
        %v735 = vpack.c.b16 %v663, %v660
        %v736 = vpack.c.b16 %v664, %v661
        %v737 = vpack.c.b16 %v665, %v662
        %v738 = vpack.c.b16 %v669, %v666
        %v739 = vpack.c.b16 %v670, %v667
        %v740 = vpack.c.b16 %v671, %v668
        %v741 = vpack.c.b16 %v675, %v672
        %v742 = vpack.c.b16 %v676, %v673
        %v743 = vpack.c.b16 %v677, %v674
        %v744 = vpack.c.b16 %v681, %v678
        %v745 = vpack.c.b16 %v682, %v679
        %v746 = vpack.c.b16 %v683, %v680
        %v747 = vpack.c.b16 %v687, %v684
        %v748 = vpack.c.b16 %v688, %v685
        %v749 = vpack.c.b16 %v689, %v686
        %v750 = vpack.c.b16 %v693, %v690
        %v751 = vpack.c.b16 %v694, %v691
        %v752 = vpack.c.b16 %v695, %v692
        %v753 = vpack.c.b16 %v699, %v696
        %v754 = vpack.c.b16 %v700, %v697
        %v755 = vpack.c.b16 %v701, %v698
        %v756 = vpack.c.b16 %v705, %v702
        %v757 = vpack.c.b16 %v706, %v703
        %v758 = vpack.c.b16 %v707, %v704
        %v759 = vpack.c.b16 %v711, %v708
        %v760 = vpack.c.b16 %v712, %v709
        %v761 = vpack.c.b16 %v713, %v710
        %810 = vmatpush.bf16.msra.mxu0 %v735
        %811 = vmatpush.bf16.msra.mxu0 %v732
        %812 = vmatpush.bf16.msra.mxu0 %v729
        %813 = vmatpush.bf16.msra.mxu0 %v726
        %814 = vmatpush.bf16.msra.mxu0 %v723
        %815 = vmatpush.bf16.msra.mxu0 %v720
        %816 = vmatpush.bf16.msra.mxu0 %v717
        %817 = vmatpush.bf16.msra.mxu0 %v714
        %818 = vmatmul.bf16.gmra.mxu0 %v490
        %v819 = vpop.f32.mrf.mxu0
        %v820 = vadd.f32 %v388, %v819
        %v821 = vpop.f32.mrf.mxu0
        %v822 = vadd.f32 %v388, %v821
        %823 = vmatmul.bf16.gmra.mxu0 %v492
        %v824 = vpop.f32.mrf.mxu0
        %v825 = vadd.f32 %v388, %v824
        %v826 = vpop.f32.mrf.mxu0
        %v827 = vadd.f32 %v388, %v826
        %828 = vmatmul.bf16.gmra.mxu0 %v494
        %v829 = vpop.f32.mrf.mxu0
        %v830 = vadd.f32 %v388, %v829
        %v831 = vpop.f32.mrf.mxu0
        %v832 = vadd.f32 %v388, %v831
        %833 = vmatmul.bf16.gmra.mxu0 %v496
        %v834 = vpop.f32.mrf.mxu0
        %v835 = vadd.f32 %v388, %v834
        %v836 = vpop.f32.mrf.mxu0
        %v837 = vadd.f32 %v388, %v836
        %838 = vmatmul.bf16.gmra.mxu0 %v498
        %v839 = vpop.f32.mrf.mxu0
        %v840 = vadd.f32 %v388, %v839
        %v841 = vpop.f32.mrf.mxu0
        %v842 = vadd.f32 %v388, %v841
        %843 = vmatmul.bf16.gmra.mxu0 %v500
        %v844 = vpop.f32.mrf.mxu0
        %v845 = vadd.f32 %v388, %v844
        %v846 = vpop.f32.mrf.mxu0
        %v847 = vadd.f32 %v388, %v846
        %848 = vmatmul.bf16.gmra.mxu0 %v502
        %v849 = vpop.f32.mrf.mxu0
        %v850 = vadd.f32 %v388, %v849
        %v851 = vpop.f32.mrf.mxu0
        %v852 = vadd.f32 %v388, %v851
        %853 = vmatmul.bf16.gmra.mxu0 %v504
        %v854 = vpop.f32.mrf.mxu0
        %v855 = vadd.f32 %v388, %v854
        %v856 = vpop.f32.mrf.mxu0
        %v857 = vadd.f32 %v388, %v856
        %858 = vmatmul.bf16.gmra.mxu0 %v506
        %v859 = vpop.f32.mrf.mxu0
        %v860 = vadd.f32 %v388, %v859
        %v861 = vpop.f32.mrf.mxu0
        %v862 = vadd.f32 %v388, %v861
        %863 = vmatmul.bf16.gmra.mxu0 %v508
        %v864 = vpop.f32.mrf.mxu0
        %v865 = vadd.f32 %v388, %v864
        %v866 = vpop.f32.mrf.mxu0
        %v867 = vadd.f32 %v388, %v866
        %868 = vmatmul.bf16.gmra.mxu0 %v510
        %v869 = vpop.f32.mrf.mxu0
        %v870 = vadd.f32 %v388, %v869
        %v871 = vpop.f32.mrf.mxu0
        %v872 = vadd.f32 %v388, %v871
        %873 = vmatmul.bf16.gmra.mxu0 %v512
        %v874 = vpop.f32.mrf.mxu0
        %v875 = vadd.f32 %v388, %v874
        %v876 = vpop.f32.mrf.mxu0
        %v877 = vadd.f32 %v388, %v876
        %878 = vmatmul.bf16.gmra.mxu0 %v514
        %v879 = vpop.f32.mrf.mxu0
        %v880 = vadd.f32 %v388, %v879
        %v881 = vpop.f32.mrf.mxu0
        %v882 = vadd.f32 %v388, %v881
        %883 = vmatmul.bf16.gmra.mxu0 %v516
        %v884 = vpop.f32.mrf.mxu0
        %v885 = vadd.f32 %v388, %v884
        %v886 = vpop.f32.mrf.mxu0
        %v887 = vadd.f32 %v388, %v886
        %888 = vmatmul.bf16.gmra.mxu0 %v518
        %v889 = vpop.f32.mrf.mxu0
        %v890 = vadd.f32 %v388, %v889
        %v891 = vpop.f32.mrf.mxu0
        %v892 = vadd.f32 %v388, %v891
        %893 = vmatmul.bf16.gmra.mxu0 %v520
        %v894 = vpop.f32.mrf.mxu0
        %v895 = vadd.f32 %v388, %v894
        %v896 = vpop.f32.mrf.mxu0
        %v897 = vadd.f32 %v388, %v896
        %898 = vdwg.mxu0
        %899 = vmatpush.bf16.msra.mxu0 %v759
        %900 = vmatpush.bf16.msra.mxu0 %v756
        %901 = vmatpush.bf16.msra.mxu0 %v753
        %902 = vmatpush.bf16.msra.mxu0 %v750
        %903 = vmatpush.bf16.msra.mxu0 %v747
        %904 = vmatpush.bf16.msra.mxu0 %v744
        %905 = vmatpush.bf16.msra.mxu0 %v741
        %906 = vmatpush.bf16.msra.mxu0 %v738
        %907 = vmatmul.bf16.gmra.mxu0 %v491
        %v908 = vpop.f32.mrf.mxu0
        %v909 = vadd.f32 %v820, %v908
        %v910 = vpop.f32.mrf.mxu0
        %v911 = vadd.f32 %v822, %v910
        %912 = vmatmul.bf16.gmra.mxu0 %v493
        %v913 = vpop.f32.mrf.mxu0
        %v914 = vadd.f32 %v825, %v913
        %v915 = vpop.f32.mrf.mxu0
        %v916 = vadd.f32 %v827, %v915
        %917 = vmatmul.bf16.gmra.mxu0 %v495
        %v918 = vpop.f32.mrf.mxu0
        %v919 = vadd.f32 %v830, %v918
        %v920 = vpop.f32.mrf.mxu0
        %v921 = vadd.f32 %v832, %v920
        %922 = vmatmul.bf16.gmra.mxu0 %v497
        %v923 = vpop.f32.mrf.mxu0
        %v924 = vadd.f32 %v835, %v923
        %v925 = vpop.f32.mrf.mxu0
        %v926 = vadd.f32 %v837, %v925
        %927 = vmatmul.bf16.gmra.mxu0 %v499
        %v928 = vpop.f32.mrf.mxu0
        %v929 = vadd.f32 %v840, %v928
        %v930 = vpop.f32.mrf.mxu0
        %v931 = vadd.f32 %v842, %v930
        %932 = vmatmul.bf16.gmra.mxu0 %v501
        %v933 = vpop.f32.mrf.mxu0
        %v934 = vadd.f32 %v845, %v933
        %v935 = vpop.f32.mrf.mxu0
        %v936 = vadd.f32 %v847, %v935
        %937 = vmatmul.bf16.gmra.mxu0 %v503
        %v938 = vpop.f32.mrf.mxu0
        %v939 = vadd.f32 %v850, %v938
        %v940 = vpop.f32.mrf.mxu0
        %v941 = vadd.f32 %v852, %v940
        %942 = vmatmul.bf16.gmra.mxu0 %v505
        %v943 = vpop.f32.mrf.mxu0
        %v944 = vadd.f32 %v855, %v943
        %v945 = vpop.f32.mrf.mxu0
        %v946 = vadd.f32 %v857, %v945
        %947 = vmatmul.bf16.gmra.mxu0 %v507
        %v948 = vpop.f32.mrf.mxu0
        %v949 = vadd.f32 %v860, %v948
        %v950 = vpop.f32.mrf.mxu0
        %v951 = vadd.f32 %v862, %v950
        %952 = vmatmul.bf16.gmra.mxu0 %v509
        %v953 = vpop.f32.mrf.mxu0
        %v954 = vadd.f32 %v865, %v953
        %v955 = vpop.f32.mrf.mxu0
        %v956 = vadd.f32 %v867, %v955
        %957 = vmatmul.bf16.gmra.mxu0 %v511
        %v958 = vpop.f32.mrf.mxu0
        %v959 = vadd.f32 %v870, %v958
        %v960 = vpop.f32.mrf.mxu0
        %v961 = vadd.f32 %v872, %v960
        %962 = vmatmul.bf16.gmra.mxu0 %v513
        %v963 = vpop.f32.mrf.mxu0
        %v964 = vadd.f32 %v875, %v963
        %v965 = vpop.f32.mrf.mxu0
        %v966 = vadd.f32 %v877, %v965
        %967 = vmatmul.bf16.gmra.mxu0 %v515
        %v968 = vpop.f32.mrf.mxu0
        %v969 = vadd.f32 %v880, %v968
        %v970 = vpop.f32.mrf.mxu0
        %v971 = vadd.f32 %v882, %v970
        %972 = vmatmul.bf16.gmra.mxu0 %v517
        %v973 = vpop.f32.mrf.mxu0
        %v974 = vadd.f32 %v885, %v973
        %v975 = vpop.f32.mrf.mxu0
        %v976 = vadd.f32 %v887, %v975
        %977 = vmatmul.bf16.gmra.mxu0 %v519
        %v978 = vpop.f32.mrf.mxu0
        %v979 = vadd.f32 %v890, %v978
        %v980 = vpop.f32.mrf.mxu0
        %v981 = vadd.f32 %v892, %v980
        %982 = vmatmul.bf16.gmra.mxu0 %v521
        %v983 = vpop.f32.mrf.mxu0
        %v984 = vadd.f32 %v895, %v983
        %v985 = vpop.f32.mrf.mxu0
        %v986 = vadd.f32 %v897, %v985
        %987 = vdwg.mxu0
        %988 = vmatpush.bf16.msra.mxu0 %v736
        %989 = vmatpush.bf16.msra.mxu0 %v733
        %990 = vmatpush.bf16.msra.mxu0 %v730
        %991 = vmatpush.bf16.msra.mxu0 %v727
        %992 = vmatpush.bf16.msra.mxu0 %v724
        %993 = vmatpush.bf16.msra.mxu0 %v721
        %994 = vmatpush.bf16.msra.mxu0 %v718
        %995 = vmatpush.bf16.msra.mxu0 %v715
        %996 = vmatmul.bf16.gmra.mxu0 %v490
        %v997 = vpop.f32.mrf.mxu0
        %v998 = vadd.f32 %v389, %v997
        %v999 = vpop.f32.mrf.mxu0
        %v1000 = vadd.f32 %v389, %v999
        %1001 = vmatmul.bf16.gmra.mxu0 %v492
        %v1002 = vpop.f32.mrf.mxu0
        %v1003 = vadd.f32 %v389, %v1002
        %v1004 = vpop.f32.mrf.mxu0
        %v1005 = vadd.f32 %v389, %v1004
        %1006 = vmatmul.bf16.gmra.mxu0 %v494
        %v1007 = vpop.f32.mrf.mxu0
        %v1008 = vadd.f32 %v389, %v1007
        %v1009 = vpop.f32.mrf.mxu0
        %v1010 = vadd.f32 %v389, %v1009
        %1011 = vmatmul.bf16.gmra.mxu0 %v496
        %v1012 = vpop.f32.mrf.mxu0
        %v1013 = vadd.f32 %v389, %v1012
        %v1014 = vpop.f32.mrf.mxu0
        %v1015 = vadd.f32 %v389, %v1014
        %1016 = vmatmul.bf16.gmra.mxu0 %v498
        %v1017 = vpop.f32.mrf.mxu0
        %v1018 = vadd.f32 %v389, %v1017
        %v1019 = vpop.f32.mrf.mxu0
        %v1020 = vadd.f32 %v389, %v1019
        %1021 = vmatmul.bf16.gmra.mxu0 %v500
        %v1022 = vpop.f32.mrf.mxu0
        %v1023 = vadd.f32 %v389, %v1022
        %v1024 = vpop.f32.mrf.mxu0
        %v1025 = vadd.f32 %v389, %v1024
        %1026 = vmatmul.bf16.gmra.mxu0 %v502
        %v1027 = vpop.f32.mrf.mxu0
        %v1028 = vadd.f32 %v389, %v1027
        %v1029 = vpop.f32.mrf.mxu0
        %v1030 = vadd.f32 %v389, %v1029
        %1031 = vmatmul.bf16.gmra.mxu0 %v504
        %v1032 = vpop.f32.mrf.mxu0
        %v1033 = vadd.f32 %v389, %v1032
        %v1034 = vpop.f32.mrf.mxu0
        %v1035 = vadd.f32 %v389, %v1034
        %1036 = vmatmul.bf16.gmra.mxu0 %v506
        %v1037 = vpop.f32.mrf.mxu0
        %v1038 = vadd.f32 %v389, %v1037
        %v1039 = vpop.f32.mrf.mxu0
        %v1040 = vadd.f32 %v389, %v1039
        %1041 = vmatmul.bf16.gmra.mxu0 %v508
        %v1042 = vpop.f32.mrf.mxu0
        %v1043 = vadd.f32 %v389, %v1042
        %v1044 = vpop.f32.mrf.mxu0
        %v1045 = vadd.f32 %v389, %v1044
        %1046 = vmatmul.bf16.gmra.mxu0 %v510
        %v1047 = vpop.f32.mrf.mxu0
        %v1048 = vadd.f32 %v389, %v1047
        %v1049 = vpop.f32.mrf.mxu0
        %v1050 = vadd.f32 %v389, %v1049
        %1051 = vmatmul.bf16.gmra.mxu0 %v512
        %v1052 = vpop.f32.mrf.mxu0
        %v1053 = vadd.f32 %v389, %v1052
        %v1054 = vpop.f32.mrf.mxu0
        %v1055 = vadd.f32 %v389, %v1054
        %1056 = vmatmul.bf16.gmra.mxu0 %v514
        %v1057 = vpop.f32.mrf.mxu0
        %v1058 = vadd.f32 %v389, %v1057
        %v1059 = vpop.f32.mrf.mxu0
        %v1060 = vadd.f32 %v389, %v1059
        %1061 = vmatmul.bf16.gmra.mxu0 %v516
        %v1062 = vpop.f32.mrf.mxu0
        %v1063 = vadd.f32 %v389, %v1062
        %v1064 = vpop.f32.mrf.mxu0
        %v1065 = vadd.f32 %v389, %v1064
        %1066 = vmatmul.bf16.gmra.mxu0 %v518
        %v1067 = vpop.f32.mrf.mxu0
        %v1068 = vadd.f32 %v389, %v1067
        %v1069 = vpop.f32.mrf.mxu0
        %v1070 = vadd.f32 %v389, %v1069
        %1071 = vmatmul.bf16.gmra.mxu0 %v520
        %v1072 = vpop.f32.mrf.mxu0
        %v1073 = vadd.f32 %v389, %v1072
        %v1074 = vpop.f32.mrf.mxu0
        %v1075 = vadd.f32 %v389, %v1074
        %1076 = vdwg.mxu0
        %1077 = vmatpush.bf16.msra.mxu0 %v760
        %1078 = vmatpush.bf16.msra.mxu0 %v757
        %1079 = vmatpush.bf16.msra.mxu0 %v754
        %1080 = vmatpush.bf16.msra.mxu0 %v751
        %1081 = vmatpush.bf16.msra.mxu0 %v748
        %1082 = vmatpush.bf16.msra.mxu0 %v745
        %1083 = vmatpush.bf16.msra.mxu0 %v742
        %1084 = vmatpush.bf16.msra.mxu0 %v739
        %1085 = vmatmul.bf16.gmra.mxu0 %v491
        %v1086 = vpop.f32.mrf.mxu0
        %v1087 = vadd.f32 %v998, %v1086
        %v1088 = vpop.f32.mrf.mxu0
        %v1089 = vadd.f32 %v1000, %v1088
        %1090 = vmatmul.bf16.gmra.mxu0 %v493
        %v1091 = vpop.f32.mrf.mxu0
        %v1092 = vadd.f32 %v1003, %v1091
        %v1093 = vpop.f32.mrf.mxu0
        %v1094 = vadd.f32 %v1005, %v1093
        %1095 = vmatmul.bf16.gmra.mxu0 %v495
        %v1096 = vpop.f32.mrf.mxu0
        %v1097 = vadd.f32 %v1008, %v1096
        %v1098 = vpop.f32.mrf.mxu0
        %v1099 = vadd.f32 %v1010, %v1098
        %1100 = vmatmul.bf16.gmra.mxu0 %v497
        %v1101 = vpop.f32.mrf.mxu0
        %v1102 = vadd.f32 %v1013, %v1101
        %v1103 = vpop.f32.mrf.mxu0
        %v1104 = vadd.f32 %v1015, %v1103
        %1105 = vmatmul.bf16.gmra.mxu0 %v499
        %v1106 = vpop.f32.mrf.mxu0
        %v1107 = vadd.f32 %v1018, %v1106
        %v1108 = vpop.f32.mrf.mxu0
        %v1109 = vadd.f32 %v1020, %v1108
        %1110 = vmatmul.bf16.gmra.mxu0 %v501
        %v1111 = vpop.f32.mrf.mxu0
        %v1112 = vadd.f32 %v1023, %v1111
        %v1113 = vpop.f32.mrf.mxu0
        %v1114 = vadd.f32 %v1025, %v1113
        %1115 = vmatmul.bf16.gmra.mxu0 %v503
        %v1116 = vpop.f32.mrf.mxu0
        %v1117 = vadd.f32 %v1028, %v1116
        %v1118 = vpop.f32.mrf.mxu0
        %v1119 = vadd.f32 %v1030, %v1118
        %1120 = vmatmul.bf16.gmra.mxu0 %v505
        %v1121 = vpop.f32.mrf.mxu0
        %v1122 = vadd.f32 %v1033, %v1121
        %v1123 = vpop.f32.mrf.mxu0
        %v1124 = vadd.f32 %v1035, %v1123
        %1125 = vmatmul.bf16.gmra.mxu0 %v507
        %v1126 = vpop.f32.mrf.mxu0
        %v1127 = vadd.f32 %v1038, %v1126
        %v1128 = vpop.f32.mrf.mxu0
        %v1129 = vadd.f32 %v1040, %v1128
        %1130 = vmatmul.bf16.gmra.mxu0 %v509
        %v1131 = vpop.f32.mrf.mxu0
        %v1132 = vadd.f32 %v1043, %v1131
        %v1133 = vpop.f32.mrf.mxu0
        %v1134 = vadd.f32 %v1045, %v1133
        %1135 = vmatmul.bf16.gmra.mxu0 %v511
        %v1136 = vpop.f32.mrf.mxu0
        %v1137 = vadd.f32 %v1048, %v1136
        %v1138 = vpop.f32.mrf.mxu0
        %v1139 = vadd.f32 %v1050, %v1138
        %1140 = vmatmul.bf16.gmra.mxu0 %v513
        %v1141 = vpop.f32.mrf.mxu0
        %v1142 = vadd.f32 %v1053, %v1141
        %v1143 = vpop.f32.mrf.mxu0
        %v1144 = vadd.f32 %v1055, %v1143
        %1145 = vmatmul.bf16.gmra.mxu0 %v515
        %v1146 = vpop.f32.mrf.mxu0
        %v1147 = vadd.f32 %v1058, %v1146
        %v1148 = vpop.f32.mrf.mxu0
        %v1149 = vadd.f32 %v1060, %v1148
        %1150 = vmatmul.bf16.gmra.mxu0 %v517
        %v1151 = vpop.f32.mrf.mxu0
        %v1152 = vadd.f32 %v1063, %v1151
        %v1153 = vpop.f32.mrf.mxu0
        %v1154 = vadd.f32 %v1065, %v1153
        %1155 = vmatmul.bf16.gmra.mxu0 %v519
        %v1156 = vpop.f32.mrf.mxu0
        %v1157 = vadd.f32 %v1068, %v1156
        %v1158 = vpop.f32.mrf.mxu0
        %v1159 = vadd.f32 %v1070, %v1158
        %1160 = vmatmul.bf16.gmra.mxu0 %v521
        %v1161 = vpop.f32.mrf.mxu0
        %v1162 = vadd.f32 %v1073, %v1161
        %v1163 = vpop.f32.mrf.mxu0
        %v1164 = vadd.f32 %v1075, %v1163
        %1165 = vdwg.mxu0
        %1166 = vmatpush.bf16.msra.mxu0 %v737
        %1167 = vmatpush.bf16.msra.mxu0 %v734
        %1168 = vmatpush.bf16.msra.mxu0 %v731
        %1169 = vmatpush.bf16.msra.mxu0 %v728
        %1170 = vmatpush.bf16.msra.mxu0 %v725
        %1171 = vmatpush.bf16.msra.mxu0 %v722
        %1172 = vmatpush.bf16.msra.mxu0 %v719
        %1173 = vmatpush.bf16.msra.mxu0 %v716
        %1174 = vmatmul.bf16.gmra.mxu0 %v490
        %v1175 = vpop.f32.mrf.mxu0
        %v1176 = vadd.f32 %v390, %v1175
        %v1177 = vpop.f32.mrf.mxu0
        %v1178 = vadd.f32 %v390, %v1177
        %1179 = vmatmul.bf16.gmra.mxu0 %v492
        %v1180 = vpop.f32.mrf.mxu0
        %v1181 = vadd.f32 %v390, %v1180
        %v1182 = vpop.f32.mrf.mxu0
        %v1183 = vadd.f32 %v390, %v1182
        %1184 = vmatmul.bf16.gmra.mxu0 %v494
        %v1185 = vpop.f32.mrf.mxu0
        %v1186 = vadd.f32 %v390, %v1185
        %v1187 = vpop.f32.mrf.mxu0
        %v1188 = vadd.f32 %v390, %v1187
        %1189 = vmatmul.bf16.gmra.mxu0 %v496
        %v1190 = vpop.f32.mrf.mxu0
        %v1191 = vadd.f32 %v390, %v1190
        %v1192 = vpop.f32.mrf.mxu0
        %v1193 = vadd.f32 %v390, %v1192
        %1194 = vmatmul.bf16.gmra.mxu0 %v498
        %v1195 = vpop.f32.mrf.mxu0
        %v1196 = vadd.f32 %v390, %v1195
        %v1197 = vpop.f32.mrf.mxu0
        %v1198 = vadd.f32 %v390, %v1197
        %1199 = vmatmul.bf16.gmra.mxu0 %v500
        %v1200 = vpop.f32.mrf.mxu0
        %v1201 = vadd.f32 %v390, %v1200
        %v1202 = vpop.f32.mrf.mxu0
        %v1203 = vadd.f32 %v390, %v1202
        %1204 = vmatmul.bf16.gmra.mxu0 %v502
        %v1205 = vpop.f32.mrf.mxu0
        %v1206 = vadd.f32 %v390, %v1205
        %v1207 = vpop.f32.mrf.mxu0
        %v1208 = vadd.f32 %v390, %v1207
        %1209 = vmatmul.bf16.gmra.mxu0 %v504
        %v1210 = vpop.f32.mrf.mxu0
        %v1211 = vadd.f32 %v390, %v1210
        %v1212 = vpop.f32.mrf.mxu0
        %v1213 = vadd.f32 %v390, %v1212
        %1214 = vmatmul.bf16.gmra.mxu0 %v506
        %v1215 = vpop.f32.mrf.mxu0
        %v1216 = vadd.f32 %v390, %v1215
        %v1217 = vpop.f32.mrf.mxu0
        %v1218 = vadd.f32 %v390, %v1217
        %1219 = vmatmul.bf16.gmra.mxu0 %v508
        %v1220 = vpop.f32.mrf.mxu0
        %v1221 = vadd.f32 %v390, %v1220
        %v1222 = vpop.f32.mrf.mxu0
        %v1223 = vadd.f32 %v390, %v1222
        %1224 = vmatmul.bf16.gmra.mxu0 %v510
        %v1225 = vpop.f32.mrf.mxu0
        %v1226 = vadd.f32 %v390, %v1225
        %v1227 = vpop.f32.mrf.mxu0
        %v1228 = vadd.f32 %v390, %v1227
        %1229 = vmatmul.bf16.gmra.mxu0 %v512
        %v1230 = vpop.f32.mrf.mxu0
        %v1231 = vadd.f32 %v390, %v1230
        %v1232 = vpop.f32.mrf.mxu0
        %v1233 = vadd.f32 %v390, %v1232
        %1234 = vmatmul.bf16.gmra.mxu0 %v514
        %v1235 = vpop.f32.mrf.mxu0
        %v1236 = vadd.f32 %v390, %v1235
        %v1237 = vpop.f32.mrf.mxu0
        %v1238 = vadd.f32 %v390, %v1237
        %1239 = vmatmul.bf16.gmra.mxu0 %v516
        %v1240 = vpop.f32.mrf.mxu0
        %v1241 = vadd.f32 %v390, %v1240
        %v1242 = vpop.f32.mrf.mxu0
        %v1243 = vadd.f32 %v390, %v1242
        %1244 = vmatmul.bf16.gmra.mxu0 %v518
        %v1245 = vpop.f32.mrf.mxu0
        %v1246 = vadd.f32 %v390, %v1245
        %v1247 = vpop.f32.mrf.mxu0
        %v1248 = vadd.f32 %v390, %v1247
        %1249 = vmatmul.bf16.gmra.mxu0 %v520
        %v1250 = vpop.f32.mrf.mxu0
        %v1251 = vadd.f32 %v390, %v1250
        %v1252 = vpop.f32.mrf.mxu0
        %v1253 = vadd.f32 %v390, %v1252
        %1254 = vdwg.mxu0
        %1255 = vmatpush.bf16.msra.mxu0 %v761
        %1256 = vmatpush.bf16.msra.mxu0 %v758
        %1257 = vmatpush.bf16.msra.mxu0 %v755
        %1258 = vmatpush.bf16.msra.mxu0 %v752
        %1259 = vmatpush.bf16.msra.mxu0 %v749
        %1260 = vmatpush.bf16.msra.mxu0 %v746
        %1261 = vmatpush.bf16.msra.mxu0 %v743
        %1262 = vmatpush.bf16.msra.mxu0 %v740
        %1263 = vmatmul.bf16.gmra.mxu0 %v491
        %v1264 = vpop.f32.mrf.mxu0
        %v1265 = vadd.f32 %v1176, %v1264
        %v1266 = vpop.f32.mrf.mxu0
        %v1267 = vadd.f32 %v1178, %v1266
        %1268 = vmatmul.bf16.gmra.mxu0 %v493
        %v1269 = vpop.f32.mrf.mxu0
        %v1270 = vadd.f32 %v1181, %v1269
        %v1271 = vpop.f32.mrf.mxu0
        %v1272 = vadd.f32 %v1183, %v1271
        %1273 = vmatmul.bf16.gmra.mxu0 %v495
        %v1274 = vpop.f32.mrf.mxu0
        %v1275 = vadd.f32 %v1186, %v1274
        %v1276 = vpop.f32.mrf.mxu0
        %v1277 = vadd.f32 %v1188, %v1276
        %1278 = vmatmul.bf16.gmra.mxu0 %v497
        %v1279 = vpop.f32.mrf.mxu0
        %v1280 = vadd.f32 %v1191, %v1279
        %v1281 = vpop.f32.mrf.mxu0
        %v1282 = vadd.f32 %v1193, %v1281
        %1283 = vmatmul.bf16.gmra.mxu0 %v499
        %v1284 = vpop.f32.mrf.mxu0
        %v1285 = vadd.f32 %v1196, %v1284
        %v1286 = vpop.f32.mrf.mxu0
        %v1287 = vadd.f32 %v1198, %v1286
        %1288 = vmatmul.bf16.gmra.mxu0 %v501
        %v1289 = vpop.f32.mrf.mxu0
        %v1290 = vadd.f32 %v1201, %v1289
        %v1291 = vpop.f32.mrf.mxu0
        %v1292 = vadd.f32 %v1203, %v1291
        %1293 = vmatmul.bf16.gmra.mxu0 %v503
        %v1294 = vpop.f32.mrf.mxu0
        %v1295 = vadd.f32 %v1206, %v1294
        %v1296 = vpop.f32.mrf.mxu0
        %v1297 = vadd.f32 %v1208, %v1296
        %1298 = vmatmul.bf16.gmra.mxu0 %v505
        %v1299 = vpop.f32.mrf.mxu0
        %v1300 = vadd.f32 %v1211, %v1299
        %v1301 = vpop.f32.mrf.mxu0
        %v1302 = vadd.f32 %v1213, %v1301
        %1303 = vmatmul.bf16.gmra.mxu0 %v507
        %v1304 = vpop.f32.mrf.mxu0
        %v1305 = vadd.f32 %v1216, %v1304
        %v1306 = vpop.f32.mrf.mxu0
        %v1307 = vadd.f32 %v1218, %v1306
        %1308 = vmatmul.bf16.gmra.mxu0 %v509
        %v1309 = vpop.f32.mrf.mxu0
        %v1310 = vadd.f32 %v1221, %v1309
        %v1311 = vpop.f32.mrf.mxu0
        %v1312 = vadd.f32 %v1223, %v1311
        %1313 = vmatmul.bf16.gmra.mxu0 %v511
        %v1314 = vpop.f32.mrf.mxu0
        %v1315 = vadd.f32 %v1226, %v1314
        %v1316 = vpop.f32.mrf.mxu0
        %v1317 = vadd.f32 %v1228, %v1316
        %1318 = vmatmul.bf16.gmra.mxu0 %v513
        %v1319 = vpop.f32.mrf.mxu0
        %v1320 = vadd.f32 %v1231, %v1319
        %v1321 = vpop.f32.mrf.mxu0
        %v1322 = vadd.f32 %v1233, %v1321
        %1323 = vmatmul.bf16.gmra.mxu0 %v515
        %v1324 = vpop.f32.mrf.mxu0
        %v1325 = vadd.f32 %v1236, %v1324
        %v1326 = vpop.f32.mrf.mxu0
        %v1327 = vadd.f32 %v1238, %v1326
        %1328 = vmatmul.bf16.gmra.mxu0 %v517
        %v1329 = vpop.f32.mrf.mxu0
        %v1330 = vadd.f32 %v1241, %v1329
        %v1331 = vpop.f32.mrf.mxu0
        %v1332 = vadd.f32 %v1243, %v1331
        %1333 = vmatmul.bf16.gmra.mxu0 %v519
        %v1334 = vpop.f32.mrf.mxu0
        %v1335 = vadd.f32 %v1246, %v1334
        %v1336 = vpop.f32.mrf.mxu0
        %v1337 = vadd.f32 %v1248, %v1336
        %1338 = vmatmul.bf16.gmra.mxu0 %v521
        %v1339 = vpop.f32.mrf.mxu0
        %v1340 = vadd.f32 %v1251, %v1339
        %v1341 = vpop.f32.mrf.mxu0
        %v1342 = vadd.f32 %v1253, %v1341
        %1343 = vdwg.mxu0
        %v1344 = vpack.c.bf16 %v1087, %v909
        %v1345 = vpack.c.bf16 %v1265, %v1265
        %v1346 = vpack.c.bf16 %v1089, %v911
        %v1347 = vpack.c.bf16 %v1267, %v1267
        %v1348 = vpack.c.bf16 %v1092, %v914
        %v1349 = vpack.c.bf16 %v1270, %v1270
        %v1350 = vpack.c.bf16 %v1094, %v916
        %v1351 = vpack.c.bf16 %v1272, %v1272
        %v1352 = vpack.c.bf16 %v1097, %v919
        %v1353 = vpack.c.bf16 %v1275, %v1275
        %v1354 = vpack.c.bf16 %v1099, %v921
        %v1355 = vpack.c.bf16 %v1277, %v1277
        %v1356 = vpack.c.bf16 %v1102, %v924
        %v1357 = vpack.c.bf16 %v1280, %v1280
        %v1358 = vpack.c.bf16 %v1104, %v926
        %v1359 = vpack.c.bf16 %v1282, %v1282
        %v1360 = vpack.c.bf16 %v1107, %v929
        %v1361 = vpack.c.bf16 %v1285, %v1285
        %v1362 = vpack.c.bf16 %v1109, %v931
        %v1363 = vpack.c.bf16 %v1287, %v1287
        %v1364 = vpack.c.bf16 %v1112, %v934
        %v1365 = vpack.c.bf16 %v1290, %v1290
        %v1366 = vpack.c.bf16 %v1114, %v936
        %v1367 = vpack.c.bf16 %v1292, %v1292
        %v1368 = vpack.c.bf16 %v1117, %v939
        %v1369 = vpack.c.bf16 %v1295, %v1295
        %v1370 = vpack.c.bf16 %v1119, %v941
        %v1371 = vpack.c.bf16 %v1297, %v1297
        %v1372 = vpack.c.bf16 %v1122, %v944
        %v1373 = vpack.c.bf16 %v1300, %v1300
        %v1374 = vpack.c.bf16 %v1124, %v946
        %v1375 = vpack.c.bf16 %v1302, %v1302
        %v1376 = vpack.c.bf16 %v1127, %v949
        %v1377 = vpack.c.bf16 %v1305, %v1305
        %v1378 = vpack.c.bf16 %v1129, %v951
        %v1379 = vpack.c.bf16 %v1307, %v1307
        %v1380 = vpack.c.bf16 %v1132, %v954
        %v1381 = vpack.c.bf16 %v1310, %v1310
        %v1382 = vpack.c.bf16 %v1134, %v956
        %v1383 = vpack.c.bf16 %v1312, %v1312
        %v1384 = vpack.c.bf16 %v1137, %v959
        %v1385 = vpack.c.bf16 %v1315, %v1315
        %v1386 = vpack.c.bf16 %v1139, %v961
        %v1387 = vpack.c.bf16 %v1317, %v1317
        %v1388 = vpack.c.bf16 %v1142, %v964
        %v1389 = vpack.c.bf16 %v1320, %v1320
        %v1390 = vpack.c.bf16 %v1144, %v966
        %v1391 = vpack.c.bf16 %v1322, %v1322
        %v1392 = vpack.c.bf16 %v1147, %v969
        %v1393 = vpack.c.bf16 %v1325, %v1325
        %v1394 = vpack.c.bf16 %v1149, %v971
        %v1395 = vpack.c.bf16 %v1327, %v1327
        %v1396 = vpack.c.bf16 %v1152, %v974
        %v1397 = vpack.c.bf16 %v1330, %v1330
        %v1398 = vpack.c.bf16 %v1154, %v976
        %v1399 = vpack.c.bf16 %v1332, %v1332
        %v1400 = vpack.c.bf16 %v1157, %v979
        %v1401 = vpack.c.bf16 %v1335, %v1335
        %v1402 = vpack.c.bf16 %v1159, %v981
        %v1403 = vpack.c.bf16 %v1337, %v1337
        %v1404 = vpack.c.bf16 %v1162, %v984
        %v1405 = vpack.c.bf16 %v1340, %v1340
        %v1406 = vpack.c.bf16 %v1164, %v986
        %v1407 = vpack.c.bf16 %v1342, %v1342
        %1408 = vst [vmem:[%s282] sm:$0xff] %v1344
        %1409 = vst [vmem:[%s282 + $0x8] sm:$0xf] %v1345
        %1410 = vst [vmem:[%s282 + $0xc] sm:$0xff] %v1346
        %1411 = vst [vmem:[%s282 + $0x14] sm:$0xf] %v1347
        %1412 = vst [vmem:[%s282 + $0x18] sm:$0xff] %v1348
        %1413 = vst [vmem:[%s282 + $0x20] sm:$0xf] %v1349
        %1414 = vst [vmem:[%s282 + $0x24] sm:$0xff] %v1350
        %1415 = vst [vmem:[%s282 + $0x2c] sm:$0xf] %v1351
        %1416 = vst [vmem:[%s282 + $0x30] sm:$0xff] %v1352
        %1417 = vst [vmem:[%s282 + $0x38] sm:$0xf] %v1353
        %1418 = vst [vmem:[%s282 + $0x3c] sm:$0xff] %v1354
        %1419 = vst [vmem:[%s282 + $0x44] sm:$0xf] %v1355
        %1420 = vst [vmem:[%s282 + $0x48] sm:$0xff] %v1356
        %1421 = vst [vmem:[%s282 + $0x50] sm:$0xf] %v1357
        %1422 = vst [vmem:[%s282 + $0x54] sm:$0xff] %v1358
        %1423 = vst [vmem:[%s282 + $0x5c] sm:$0xf] %v1359
        %1424 = vst [vmem:[%s282 + $0x60] sm:$0xff] %v1360
        %1425 = vst [vmem:[%s282 + $0x68] sm:$0xf] %v1361
        %1426 = vst [vmem:[%s282 + $0x6c] sm:$0xff] %v1362
        %1427 = vst [vmem:[%s282 + $0x74] sm:$0xf] %v1363
        %1428 = vst [vmem:[%s282 + $0x78] sm:$0xff] %v1364
        %1429 = vst [vmem:[%s282 + $0x80] sm:$0xf] %v1365
        %1430 = vst [vmem:[%s282 + $0x84] sm:$0xff] %v1366
        %1431 = vst [vmem:[%s282 + $0x8c] sm:$0xf] %v1367
        %1432 = vst [vmem:[%s282 + $0x90] sm:$0xff] %v1368
        %1433 = vst [vmem:[%s282 + $0x98] sm:$0xf] %v1369
        %1434 = vst [vmem:[%s282 + $0x9c] sm:$0xff] %v1370
        %1435 = vst [vmem:[%s282 + $0xa4] sm:$0xf] %v1371
        %1436 = vst [vmem:[%s282 + $0xa8] sm:$0xff] %v1372
        %1437 = vst [vmem:[%s282 + $0xb0] sm:$0xf] %v1373
        %1438 = vst [vmem:[%s282 + $0xb4] sm:$0xff] %v1374
        %1439 = vst [vmem:[%s282 + $0xbc] sm:$0xf] %v1375
        %1440 = vst [vmem:[%s282 + $0xc0] sm:$0xff] %v1376
        %1441 = vst [vmem:[%s282 + $0xc8] sm:$0xf] %v1377
        %1442 = vst [vmem:[%s282 + $0xcc] sm:$0xff] %v1378
        %1443 = vst [vmem:[%s282 + $0xd4] sm:$0xf] %v1379
        %1444 = vst [vmem:[%s282 + $0xd8] sm:$0xff] %v1380
        %1445 = vst [vmem:[%s282 + $0xe0] sm:$0xf] %v1381
        %1446 = vst [vmem:[%s282 + $0xe4] sm:$0xff] %v1382
        %1447 = vst [vmem:[%s282 + $0xec] sm:$0xf] %v1383
        %1448 = vst [vmem:[%s282 + $0xf0] sm:$0xff] %v1384
        %1449 = vst [vmem:[%s282 + $0xf8] sm:$0xf] %v1385
        %1450 = vst [vmem:[%s282 + $0xfc] sm:$0xff] %v1386
        %1451 = vst [vmem:[%s282 + $0x104] sm:$0xf] %v1387
        %1452 = vst [vmem:[%s282 + $0x108] sm:$0xff] %v1388
        %1453 = vst [vmem:[%s282 + $0x110] sm:$0xf] %v1389
        %1454 = vst [vmem:[%s282 + $0x114] sm:$0xff] %v1390
        %1455 = vst [vmem:[%s282 + $0x11c] sm:$0xf] %v1391
        %1456 = vst [vmem:[%s282 + $0x120] sm:$0xff] %v1392
        %1457 = vst [vmem:[%s282 + $0x128] sm:$0xf] %v1393
        %1458 = vst [vmem:[%s282 + $0x12c] sm:$0xff] %v1394
        %1459 = vst [vmem:[%s282 + $0x134] sm:$0xf] %v1395
        %1460 = vst [vmem:[%s282 + $0x138] sm:$0xff] %v1396
        %1461 = vst [vmem:[%s282 + $0x140] sm:$0xf] %v1397
        %1462 = vst [vmem:[%s282 + $0x144] sm:$0xff] %v1398
        %1463 = vst [vmem:[%s282 + $0x14c] sm:$0xf] %v1399
        %1464 = vst [vmem:[%s282 + $0x150] sm:$0xff] %v1400
        %1465 = vst [vmem:[%s282 + $0x158] sm:$0xf] %v1401
        %1466 = vst [vmem:[%s282 + $0x15c] sm:$0xff] %v1402
        %1467 = vst [vmem:[%s282 + $0x164] sm:$0xf] %v1403
        %1468 = vst [vmem:[%s282 + $0x168] sm:$0xff] %v1404
        %1469 = vst [vmem:[%s282 + $0x170] sm:$0xf] %v1405
        %1470 = vst [vmem:[%s282 + $0x174] sm:$0xff] %v1406
        %1471 = vst [vmem:[%s282 + $0x17c] sm:$0xf] %v1407
        %s1472 = sand.u32 %s132, 1
        %s1473 = scalar_lea.sflag [#allocation4], %s1472
        %s1474 = sand.u32 %s132, 1
        %s1475 = smul.addr %s1474, 384
        %s1476 = scalar_lea.vmem [#allocation8], %s1475
        // Predicated region
        $region45: #{tpu_custom_call.1} parent=31 // pred_check
          %p1477 = pneg %p142
        $region46: #{tpu_custom_call.1} parent=31 // pred_check_branch
          %1479 = sbr.rel (%p1477) target = $region48
        $region47: #{tpu_custom_call.1} parent=31 // pred_region
          %s1480 = smul.u32 32, %s26
          %s1481 = smul.u32 3, %s27
          %1483 = vsyncadd %s1473, 0
          %s1484 = smul.addr %s1480, 6
          %s1485 = sadd.s32 %s1481, %s1484
          %s1486 = smul.addr %s1485, 4
          %s1487 = scalar_lea.hbm %s3, %s1486
          %s1488 = sshll.u32 %s1476, 4
          %s1489 = int_to_ptr.vmem [resolvable:$true] %s1488
          %s1490 = sshll.u32 %s1487, 4
          %s1491 = int_to_ptr.hbm [resolvable:$true] %s1490
          %1496 = dma.vmem_to_hbm [thread:$0]  %s1489, 6144, %s1491, %s1473, 192, 384, 12
        $region48: #{tpu_custom_call.1} parent=31 // pred_fallthru
          _
      $region32: #{tpu_custom_call.1} parent=5 // pred_fallthru
        _
      %p1497 = scmp.le.s32.totalorder 2, %s16
      // Predicated region
      $region49: #{tpu_custom_call.1} parent=5 // pred_check
        %p1498 = pneg %p1497
      $region50: #{tpu_custom_call.1} parent=5 // pred_check_branch
        %1500 = sbr.rel (%p1498) target = $region52
      $region51: #{tpu_custom_call.1} parent=5 // pred_region
        %s1501 = ssub.s32 %s16, 2
        // Predicated region
        $region53: #{tpu_custom_call.1} parent=51 // pred_check
          %p1502 = pneg %p148
        $region54: #{tpu_custom_call.1} parent=51 // pred_check_branch
          %1504 = sbr.rel (%p1502) target = $region56
        $region55: #{tpu_custom_call.1} parent=51 // pred_region
          %s1505 = sand.u32 %s133, 1
          %s1506 = scalar_lea.sflag [#allocation4], %s1505
          %s1507 = sand.u32 %s133, 1
          %s1508 = smul.addr %s1507, 384
          %s1509 = scalar_lea.vmem [#allocation8], %s1508
          %1511 = dma.done %s1506, 6144
        $region56: #{tpu_custom_call.1} parent=51 // pred_fallthru
          _
      $region52: #{tpu_custom_call.1} parent=5 // pred_fallthru
        _
    $region6: #{tpu_custom_call.1} parent=1 // loop_footer
      %s20 = sadd.s32 1, %s16
    $region7: #{tpu_custom_call.1} parent=1 // loop_footer_branch
      %15 = sbr.rel target = $region3
    $region8: #{tpu_custom_call.1} parent=1 // loop_exit
      _
    %1512 = vsyncpa [#allocation3], 1
    %s1513 = scalar_lea.sflag [#allocation3], 1
    %1514 = vsyncpa %s1513, 1
    %1515 = vsyncpa [#allocation6], 1
    %s1516 = scalar_lea.sflag [#allocation6], 1
    %1517 = vsyncpa %s1516, 1
    %1518 = vsyncpa [#allocation4], 1
    %s1519 = scalar_lea.sflag [#allocation4], 1
    %1520 = vsyncpa %s1519, 1

</llo_original>
